<compile_context>
chip_gen: v7x
topology: tpu7x:2x2x1
jax: 0.10.0
libtpu: 0.0.40
codegen_flags: <defaults>
</compile_context>

<pallas_src>
import functools
import math

import jax
import jax.numpy as jnp
from jax.experimental import pallas as pl
from jax.experimental.pallas import tpu as pltpu


# ----------------------------------------------------------------------------
# Pass 1: global average pool + Conv1d-over-channels (banded matmul) + sigmoid
# ----------------------------------------------------------------------------
def eca_pool_excite_kernel(x_ref, band_ref, scale_ref, acc_ref, *, inv_hw):
    # x_ref:     (1, TH, W, C)  input tile
    # band_ref:  (C, C)         banded matrix encoding Conv1d(1,1,k) (cross-corr)
    # scale_ref: (1, 1, C)      output: per-(batch, channel) attention weight
    # acc_ref:   (1, C) f32     scratch accumulator, carried across the H axis
    h = pl.program_id(1)

    @pl.when(h == 0)
    def _():
        acc_ref[...] = jnp.zeros_like(acc_ref)

    # Partial per-channel spatial sum of this H tile (channels stay on lanes).
    acc_ref[...] += jnp.sum(x_ref[...].astype(jnp.float32), axis=(1, 2))

    @pl.when(h == pl.num_programs(1) - 1)
    def _():
        mean = acc_ref[...] * inv_hw                                   # (1, C)
        # Conv1d(1,1,k, pad=(k-1)//2, bias=False) over channels as one matmul.
        y = jnp.dot(mean, band_ref[...], preferred_element_type=jnp.float32)
        sig = 1.0 / (1.0 + jnp.exp(-y))                                # (1, C)
        scale_ref[...] = sig[:, None, :].astype(scale_ref.dtype)


# ----------------------------------------------------------------------------
# Pass 2: out = x * scale (broadcast over H, W)
# ----------------------------------------------------------------------------
def eca_scale_kernel(x_ref, s_ref, o_ref):
    # x_ref: (1, TH, W, C)   s_ref: (1, 1, C)   o_ref: (1, TH, W, C)
    o_ref[...] = (x_ref[...].astype(jnp.float32) * s_ref[...]).astype(o_ref.dtype)


# ----------------------------------------------------------------------------
# Wrapper (glue): banded-matrix construction, tile sizing, pallas_call plumbing
# ----------------------------------------------------------------------------
def _band_matrix(w, C):
    """(C, C) matrix B such that mean @ B == Conv1d(1,1,k,pad=(k-1)//2)(mean)."""
    k = w.shape[0]
    pad = (k - 1) // 2
    band = jnp.zeros((C, C), jnp.float32)
    for i in range(k):
        band = band + w[i] * jnp.eye(C, k=pad - i, dtype=jnp.float32)
    return band


def _pick_tile_h(H, W, C, itemsize, target_bytes=1 << 20):
    """Largest divisor of H whose (TH, W, C) tile stays under target_bytes."""
    best = 1
    for th in range(1, H + 1):
        if H % th == 0 and th * W * C * itemsize <= target_bytes:
            best = th
    return best


@functools.partial(jax.jit, static_argnames=("tile_h",))
def eca_forward(x, conv_w, tile_h=None):
    """ECA forward.  x: (N, H, W, C) NHWC;  conv_w: Conv1d weight (1, 1, k)."""
    N, H, W, C = x.shape
    w = conv_w.reshape(-1).astype(jnp.float32)
    band = _band_matrix(w, C)

    th = tile_h if tile_h is not None else _pick_tile_h(
        H, W, C, jnp.dtype(x.dtype).itemsize)
    assert H % th == 0, (H, th)
    n_h = H // th

    # Pass 1: per-(batch, channel) attention weights.
    scale = pl.pallas_call(
        functools.partial(eca_pool_excite_kernel, inv_hw=1.0 / (H * W)),
        out_shape=jax.ShapeDtypeStruct((N, 1, C), jnp.float32),
        grid=(N, n_h),
        in_specs=[
            pl.BlockSpec((1, th, W, C), lambda n, h: (n, h, 0, 0)),
            pl.BlockSpec((C, C), lambda n, h: (0, 0)),
        ],
        out_specs=pl.BlockSpec((1, 1, C), lambda n, h: (n, 0, 0)),
        scratch_shapes=[pltpu.VMEM((1, C), jnp.float32)],
        compiler_params=pltpu.CompilerParams(
            dimension_semantics=("parallel", "arbitrary")),
    )(x, band)

    # Pass 2: rescale the input.
    return pl.pallas_call(
        eca_scale_kernel,
        out_shape=jax.ShapeDtypeStruct((N, H, W, C), x.dtype),
        grid=(N, n_h),
        in_specs=[
            pl.BlockSpec((1, th, W, C), lambda n, h: (n, h, 0, 0)),
            pl.BlockSpec((1, 1, C), lambda n, h: (n, 0, 0)),
        ],
        out_specs=pl.BlockSpec((1, th, W, C), lambda n, h: (n, h, 0, 0)),
        compiler_params=pltpu.CompilerParams(
            dimension_semantics=("parallel", "parallel")),
    )(x, scale)


# ----------------------------------------------------------------------------
# Pure-JAX reference (for correctness check of the kernels).
# ----------------------------------------------------------------------------
def eca_reference(x, conv_w):
    w = conv_w.reshape(-1).astype(jnp.float32)
    k = w.shape[0]
    pad = (k - 1) // 2
    m = jnp.mean(x.astype(jnp.float32), axis=(1, 2))                 # (N, C)
    mp = jnp.pad(m, ((0, 0), (pad, pad)))
    y = sum(w[i] * mp[:, i:i + m.shape[1]] for i in range(k))        # cross-corr
    s = jax.nn.sigmoid(y)
    return (x.astype(jnp.float32) * s[:, None, None, :]).astype(x.dtype)


if __name__ == "__main__":
    key = jax.random.PRNGKey(0)
    kx, kw = jax.random.split(key)

    # Small NHWC test shapes (PyTorch NCHW [2, 64, 16, 16] transposed to NHWC).
    N, H, W, C = 2, 16, 16, 64
    k_size = 3

    x = jax.random.normal(kx, (N, H, W, C), jnp.float32)
    # PyTorch Conv1d(1, 1, 3, bias=False) default init: U(-1/sqrt(k), 1/sqrt(k)).
    bound = 1.0 / math.sqrt(k_size)
    conv_w = jax.random.uniform(kw, (1, 1, k_size), jnp.float32, -bound, bound)

    # tile_h=8 forces a 2-step reduction along the H-tile axis so the
    # accumulate/finalize path is exercised even at this small spatial size.
    out = jax.block_until_ready(eca_forward(x, conv_w, tile_h=8))
    ref = jax.block_until_ready(eca_reference(x, conv_w))

    assert out.shape == (N, H, W, C), out.shape
    assert jnp.allclose(out, ref, rtol=1e-4, atol=1e-4), (
        float(jnp.max(jnp.abs(out - ref))))

    print("KERNEL_OK")
</pallas_src>

<mosaic_0001>
module attributes {stable_mosaic.version = 11 : i64} {
  func.func @eca_pool_excite_kernel(%arg0: i32, %arg1: i32, %arg2: memref<1x8x16x64xf32, #tpu.memory_space<vmem>>, %arg3: memref<64x64xf32, #tpu.memory_space<vmem>>, %arg4: memref<1x1x64xf32, #tpu.memory_space<vmem>>, %arg5: memref<1x64xf32, #tpu.memory_space<vmem>>) attributes {dimension_semantics = [#tpu.dimension_semantics<parallel>, #tpu.dimension_semantics<arbitrary>], iteration_bounds = array<i64: 2, 2>, scalar_prefetch = 0 : i64, scratch_operands = 1 : i64, tpu.core_type = #tpu.core_type<tc>, window_params = [{transform_indices = @transform_0, window_bounds = array<i64: 1, 8, 16, 64>}, {pipeline_mode = #tpu.pipeline_mode<synchronous>, transform_indices = @transform_1, window_bounds = array<i64: 64, 64>}, {transform_indices = @transform_2, window_bounds = array<i64: 1, 1, 64>}]} {
    %c0_i32 = arith.constant 0 : i32
    %0 = arith.cmpi eq, %arg1, %c0_i32 : i32
    %1 = arith.extui %0 : i1 to i32
    %c0_i32_0 = arith.constant 0 : i32
    %2 = arith.cmpi ne, %1, %c0_i32_0 : i32
    scf.if %2 {
      %cst_9 = arith.constant 0.000000e+00 : f32
      %11 = vector.broadcast %cst_9 : f32 to vector<1x64xf32>
      %c0_10 = arith.constant 0 : index
      %c0_11 = arith.constant 0 : index
      %12 = vector.load %arg5[%c0_10, %c0_11] : memref<1x64xf32, #tpu.memory_space<vmem>>, vector<1x64xf32>
      tpu.vector_store %arg5[%c0_10, %c0_11], %11 {strides = array<i32>} : memref<1x64xf32, #tpu.memory_space<vmem>>, vector<1x64xf32>,
    } else {
    }
    %c0 = arith.constant 0 : index
    %c0_1 = arith.constant 0 : index
    %3 = vector.load %arg5[%c0, %c0_1] : memref<1x64xf32, #tpu.memory_space<vmem>>, vector<1x64xf32>
    %c0_2 = arith.constant 0 : index
    %c0_3 = arith.constant 0 : index
    %c0_4 = arith.constant 0 : index
    %c0_5 = arith.constant 0 : index
    %4 = vector.load %arg2[%c0_2, %c0_3, %c0_4, %c0_5] : memref<1x8x16x64xf32, #tpu.memory_space<vmem>>, vector<1x8x16x64xf32>
    %cst = arith.constant dense<0.000000e+00> : vector<1x64xf32>
    %5 = vector.multi_reduction <add>, %4, %cst [1, 2] : vector<1x8x16x64xf32> to vector<1x64xf32>
    %6 = arith.addf %3, %5 : vector<1x64xf32>
    %c0_6 = arith.constant 0 : index
    %c0_7 = arith.constant 0 : index
    %7 = vector.load %arg5[%c0_6, %c0_7] : memref<1x64xf32, #tpu.memory_space<vmem>>, vector<1x64xf32>
    tpu.vector_store %arg5[%c0_6, %c0_7], %6 {strides = array<i32>} : memref<1x64xf32, #tpu.memory_space<vmem>>, vector<1x64xf32>,
    %c1_i32 = arith.constant 1 : i32
    %8 = arith.cmpi eq, %arg1, %c1_i32 : i32
    %9 = arith.extui %8 : i1 to i32
    %c0_i32_8 = arith.constant 0 : i32
    %10 = arith.cmpi ne, %9, %c0_i32_8 : i32
    scf.if %10 {
      %c0_9 = arith.constant 0 : index
      %c0_10 = arith.constant 0 : index
      %11 = vector.load %arg5[%c0_9, %c0_10] : memref<1x64xf32, #tpu.memory_space<vmem>>, vector<1x64xf32>
      %cst_11 = arith.constant 3.906250e-03 : f32
      %12 = vector.broadcast %cst_11 : f32 to vector<1x64xf32>
      %13 = arith.mulf %11, %12 : vector<1x64xf32>
      %c0_12 = arith.constant 0 : index
      %c0_13 = arith.constant 0 : index
      %14 = vector.load %arg3[%c0_12, %c0_13] : memref<64x64xf32, #tpu.memory_space<vmem>>, vector<64x64xf32>
      %cst_14 = arith.constant dense<0.000000e+00> : vector<1x64xf32>
      %15 = tpu.matmul %13, %14, %cst_14 {dimension_numbers = #tpu.dot_dimension_numbers<[1], [0], [0], [1], [0, 0, 1, 1], [], []>} : vector<1x64xf32>, vector<64x64xf32>, vector<1x64xf32> -> vector<1x64xf32>
      %cst_15 = arith.constant 0.000000e+00 : f32
      %16 = vector.broadcast %cst_15 : f32 to vector<1x64xf32>
      %17 = arith.subf %16, %15 : vector<1x64xf32>
      %18 = math.exp %17 : vector<1x64xf32>
      %cst_16 = arith.constant 1.000000e+00 : f32
      %19 = vector.broadcast %cst_16 : f32 to vector<1x64xf32>
      %20 = arith.addf %19, %18 : vector<1x64xf32>
      %cst_17 = arith.constant 1.000000e+00 : f32
      %21 = vector.broadcast %cst_17 : f32 to vector<1x64xf32>
      %22 = arith.divf %21, %20 : vector<1x64xf32>
      %23 = vector.shape_cast %22 : vector<1x64xf32> to vector<1x1x64xf32>
      %c0_18 = arith.constant 0 : index
      %c0_19 = arith.constant 0 : index
      %c0_20 = arith.constant 0 : index
      %24 = vector.load %arg4[%c0_18, %c0_19, %c0_20] : memref<1x1x64xf32, #tpu.memory_space<vmem>>, vector<1x1x64xf32>
      tpu.vector_store %arg4[%c0_18, %c0_19, %c0_20], %23 {strides = array<i32>} : memref<1x1x64xf32, #tpu.memory_space<vmem>>, vector<1x1x64xf32>,
    } else {
    }
    return
  }
  func.func @transform_0(%arg0: i32, %arg1: i32) -> (i32, i32, i32, i32) {
    %c0_i32 = arith.constant 0 : i32
    %c0_i32_0 = arith.constant 0 : i32
    %c0_i32_1 = arith.constant 0 : i32
    return %arg0, %arg1, %c0_i32, %c0_i32_0 : i32, i32, i32, i32
  }
  func.func @transform_1(%arg0: i32, %arg1: i32) -> (i32, i32) {
    %c0_i32 = arith.constant 0 : i32
    %c0_i32_0 = arith.constant 0 : i32
    %c0_i32_1 = arith.constant 0 : i32
    return %c0_i32, %c0_i32_0 : i32, i32
  }
  func.func @transform_2(%arg0: i32, %arg1: i32) -> (i32, i32, i32) {
    %c0_i32 = arith.constant 0 : i32
    %c0_i32_0 = arith.constant 0 : i32
    %c0_i32_1 = arith.constant 0 : i32
    return %arg0, %c0_i32, %c0_i32_0 : i32, i32, i32
  }
}

module attributes {stable_mosaic.version = 11 : i64} {
  func.func @eca_scale_kernel(%arg0: i32, %arg1: i32, %arg2: memref<1x8x16x64xf32, #tpu.memory_space<vmem>>, %arg3: memref<1x1x64xf32, #tpu.memory_space<vmem>>, %arg4: memref<1x8x16x64xf32, #tpu.memory_space<vmem>>) attributes {dimension_semantics = [#tpu.dimension_semantics<parallel>, #tpu.dimension_semantics<parallel>], iteration_bounds = array<i64: 2, 2>, scalar_prefetch = 0 : i64, scratch_operands = 0 : i64, tpu.core_type = #tpu.core_type<tc>, window_params = [{transform_indices = @transform_0, window_bounds = array<i64: 1, 8, 16, 64>}, {transform_indices = @transform_1, window_bounds = array<i64: 1, 1, 64>}, {transform_indices = @transform_2, window_bounds = array<i64: 1, 8, 16, 64>}]} {
    %c0 = arith.constant 0 : index
    %c0_0 = arith.constant 0 : index
    %c0_1 = arith.constant 0 : index
    %c0_2 = arith.constant 0 : index
    %0 = vector.load %arg2[%c0, %c0_0, %c0_1, %c0_2] : memref<1x8x16x64xf32, #tpu.memory_space<vmem>>, vector<1x8x16x64xf32>
    %c0_3 = arith.constant 0 : index
    %c0_4 = arith.constant 0 : index
    %c0_5 = arith.constant 0 : index
    %1 = vector.load %arg3[%c0_3, %c0_4, %c0_5] : memref<1x1x64xf32, #tpu.memory_space<vmem>>, vector<1x1x64xf32>
    %2 = vector.shape_cast %1 : vector<1x1x64xf32> to vector<1x1x1x64xf32>
    %3 = vector.broadcast %2 : vector<1x1x1x64xf32> to vector<1x8x16x64xf32>
    %4 = arith.mulf %0, %3 : vector<1x8x16x64xf32>
    %c0_6 = arith.constant 0 : index
    %c0_7 = arith.constant 0 : index
    %c0_8 = arith.constant 0 : index
    %c0_9 = arith.constant 0 : index
    %5 = vector.load %arg4[%c0_6, %c0_7, %c0_8, %c0_9] : memref<1x8x16x64xf32, #tpu.memory_space<vmem>>, vector<1x8x16x64xf32>
    tpu.vector_store %arg4[%c0_6, %c0_7, %c0_8, %c0_9], %4 {strides = array<i32>} : memref<1x8x16x64xf32, #tpu.memory_space<vmem>>, vector<1x8x16x64xf32>,
    return
  }
  func.func @transform_0(%arg0: i32, %arg1: i32) -> (i32, i32, i32, i32) {
    %c0_i32 = arith.constant 0 : i32
    %c0_i32_0 = arith.constant 0 : i32
    %c0_i32_1 = arith.constant 0 : i32
    return %arg0, %arg1, %c0_i32, %c0_i32_0 : i32, i32, i32, i32
  }
  func.func @transform_1(%arg0: i32, %arg1: i32) -> (i32, i32, i32) {
    %c0_i32 = arith.constant 0 : i32
    %c0_i32_0 = arith.constant 0 : i32
    %c0_i32_1 = arith.constant 0 : i32
    return %arg0, %c0_i32, %c0_i32_0 : i32, i32, i32
  }
  func.func @transform_2(%arg0: i32, %arg1: i32) -> (i32, i32, i32, i32) {
    %c0_i32 = arith.constant 0 : i32
    %c0_i32_0 = arith.constant 0 : i32
    %c0_i32_1 = arith.constant 0 : i32
    return %arg0, %arg1, %c0_i32, %c0_i32_0 : i32, i32, i32, i32
  }
}

</mosaic_0001>

<llo_original>
// kernel: eca_forward.2
$region0: #{eca_forward.2}
  #allocation0 [shape = 'u32[]', space=smem, size = 0x4, offset = 0x4, fixed_abs, tag = 'smem constant byte address 0x4 - core index']
  #allocation1 [shape = 'u32[144,128]{1,0:T(1,128)}', space=vmem, size = 0x12000, scoped, tag = 'internal scratch']
  #allocation2 [shape = 'f32[1,64]{1,0:T(1,128)}', space=vmem, size = 0x200, scoped, tag = 'scratch operand']
  %s0 = inlined_call_operand.hbm [shape: f32[2,16,16,64], index: 0, kind: input, shape index: {}]
  %s1 = inlined_call_operand.vmem [shape: f32[64,64], index: 1, kind: input, shape index: {}]
  %s2 = inlined_call_operand.vmem [shape: f32[2,1,64], index: 2, kind: output, shape index: {}]
  %s3 = sld [smem:[#allocation0]]
  $region53: #{eca_forward.2} parent=0
    _
  %s5 = ssub.s32 1, %s3
  %s6 = scalar_select 0, %s5, %s3
  $region1: #{eca_forward.2} parent=0
    #allocation3 [shape = 'u8[131072]{0}', space=vmem, size = 0x20000, scoped, tag = 'input window, operand 0']
    #allocation4 [shape = 's32[2]{0}', space=sflag, size = 0x8, scoped, tag = 'scoped memory for eca_forward.2']
    %7 = vsyncpa [#allocation4], 0
    %s8 = scalar_lea.sflag [#allocation4], 1
    %9 = vsyncpa %s8, 0
    loop: start=0, step=1, limit=6
    $region2: #{eca_forward.2} parent=1 // loop_pre_header
      _
    $region3: #{eca_forward.2} parent=1 // loop_header
      %s11 = sphi 0, %s15
      %p12 = scmp.ge.s32.totalorder %s11, 6
      %s18 = sphi 0, %s30
      %s19 = sphi 0, %s26
      %s20 = sphi 0, %s18
      %s21 = sphi 0, %s19
      %s22 = sphi 0, %s20
      %s23 = sphi 0, %s21
      %s35 = sphi 0, %s37
      %s38 = sphi 0, %s35
      %s39 = sphi 0, %s38
      %s55 = sphi 0, %s39
      %s59 = sphi 0, %s59
      %s61 = sphi 0, %s59
      %s62 = sphi 0, %s61
      %s76 = sphi 0, %s62
      %s82 = sphi 0, %s84
      %s85 = sphi 0, %s82
      %s86 = sphi 0, %s85
      %s102 = sphi 0, %s86
    $region4: #{eca_forward.2} parent=1 // loop_header_branch
      %14 = sbr.rel (%p12) target = $region8
    $region5: #{eca_forward.2} parent=1 // loop_body
      %s16 = ssub.s32 %s11, 1
      %s17 = ssub.s32 %s11, 2
      %s24 = sadd.s32 1, %s19
      %p25 = scmp.ge.s32.totalorder %s24, 2
      %s26 = scalar_select %p25, 0, %s24
      %s27 = sadd.s32 1, %s18
      %s28 = scalar_select %p25, %s27, %s18
      %p29 = scmp.ge.s32.totalorder %s28, 2
      %s30 = scalar_select %p29, 0, %s28
      %s31 = ssub.s32 %s18, %s30
      %s32 = ssub.s32 %s19, %s26
      %s33 = sor.u32 %s31, %s32
      %p34 = scmp.eq.s32.totalorder %s33, 0
      %s36 = sadd.s32 %s35, 1
      %s37 = scalar_select %p34, %s35, %s36
      %p40 = pneg %p34
      %p41 = scmp.eq.s32.totalorder %s11, 3
      %p42 = por %p40, %p41
      %p43 = scmp.ne.s32.totalorder %s35, %s38
      %p44 = scmp.eq.s32.totalorder %s11, 0
      %p45 = por %p43, %p44
      %p46 = scmp.ne.s32.totalorder %s35, %s38
      %p47 = scmp.eq.s32.totalorder %s16, 3
      %p48 = por %p46, %p47
      %p49 = scmp.ne.s32.totalorder %s38, %s39
      %p50 = scmp.eq.s32.totalorder %s16, 0
      %p51 = por %p49, %p50
      %p52 = scmp.ne.s32.totalorder %s38, %s39
      %p53 = scmp.eq.s32.totalorder %s17, 3
      %p54 = por %p52, %p53
      %p56 = scmp.ne.s32.totalorder %s39, %s55
      %p57 = scmp.eq.s32.totalorder %s17, 0
      %p58 = por %p56, %p57
      %s60 = sadd.s32 %s59, 1
      %p63 = scmp.eq.s32.totalorder %s11, 3
      %p64 = scmp.ne.s32.totalorder %s59, %s61
      %p65 = scmp.eq.s32.totalorder %s11, 0
      %p66 = por %p64, %p65
      %p67 = scmp.ne.s32.totalorder %s59, %s61
      %p68 = scmp.eq.s32.totalorder %s16, 3
      %p69 = por %p67, %p68
      %p70 = scmp.ne.s32.totalorder %s61, %s62
      %p71 = scmp.eq.s32.totalorder %s16, 0
      %p72 = por %p70, %p71
      %p73 = scmp.ne.s32.totalorder %s61, %s62
      %p74 = scmp.eq.s32.totalorder %s17, 3
      %p75 = por %p73, %p74
      %p77 = scmp.ne.s32.totalorder %s62, %s76
      %p78 = scmp.eq.s32.totalorder %s17, 0
      %p79 = por %p77, %p78
      %s80 = ssub.s32 %s18, %s30
      %p81 = scmp.eq.s32.totalorder %s80, 0
      %s83 = sadd.s32 %s82, 1
      %s84 = scalar_select %p81, %s82, %s83
      %p87 = pneg %p81
      %p88 = scmp.eq.s32.totalorder %s11, 3
      %p89 = por %p87, %p88
      %p90 = scmp.ne.s32.totalorder %s82, %s85
      %p91 = scmp.eq.s32.totalorder %s11, 0
      %p92 = por %p90, %p91
      %p93 = scmp.ne.s32.totalorder %s82, %s85
      %p94 = scmp.eq.s32.totalorder %s16, 3
      %p95 = por %p93, %p94
      %p96 = scmp.ne.s32.totalorder %s85, %s86
      %p97 = scmp.eq.s32.totalorder %s16, 0
      %p98 = por %p96, %p97
      %p99 = scmp.ne.s32.totalorder %s85, %s86
      %p100 = scmp.eq.s32.totalorder %s17, 3
      %p101 = por %p99, %p100
      %p103 = scmp.ne.s32.totalorder %s86, %s102
      %p104 = scmp.eq.s32.totalorder %s17, 0
      %p105 = por %p103, %p104
      %p106 = scmp.le.s32.totalorder 1, %s11
      %p107 = scmp.lt.s32.totalorder %s11, 5
      %p108 = pnand %p106, %p107
      %p109 = pneg %p108
      // Predicated region
      $region9: #{eca_forward.2} parent=5 // pred_check
        _
      $region10: #{eca_forward.2} parent=5 // pred_check_branch
        %111 = sbr.rel (%p108) target = $region12
      $region11: #{eca_forward.2} parent=5 // pred_region
        %s112 = ssub.s32 %s11, 1
        // Predicated region
        $region13: #{eca_forward.2} parent=11 // pred_check
          %p113 = pneg %p72
        $region14: #{eca_forward.2} parent=11 // pred_check_branch
          %115 = sbr.rel (%p113) target = $region16
        $region15: #{eca_forward.2} parent=11 // pred_region
          _
        $region16: #{eca_forward.2} parent=11 // pred_fallthru
          _
      $region12: #{eca_forward.2} parent=5 // pred_fallthru
        _
      %p116 = scmp.lt.s32.totalorder %s11, 4
      // Predicated region
      $region17: #{eca_forward.2} parent=5 // pred_check
        %p117 = pneg %p116
      $region18: #{eca_forward.2} parent=5 // pred_check_branch
        %119 = sbr.rel (%p117) target = $region20
      $region19: #{eca_forward.2} parent=5 // pred_region
        // Predicated region
        $region21: #{eca_forward.2} parent=19 // pred_check
          %p120 = pneg %p45
        $region22: #{eca_forward.2} parent=19 // pred_check_branch
          %122 = sbr.rel (%p120) target = $region24
        $region23: #{eca_forward.2} parent=19 // pred_region
          %s123 = sand.u32 %s35, 1
          %s124 = scalar_lea.sflag [#allocation4], %s123
          %s125 = sand.u32 %s35, 1
          %s126 = smul.addr %s125, 128
          %s127 = scalar_lea.vmem [#allocation3], %s126
          %s128 = smul.u32 8, %s19
          %s130 = ssub.s32 2048, 2048
          %131 = vsyncadd %s124, %s130
          %s132 = smul.addr %s128, 2
          %s133 = smul.addr %s18, 32
          %s134 = sadd.s32 %s132, %s133
          %s135 = smul.addr %s134, 128
          %s136 = scalar_lea.hbm %s0, %s135
          %s137 = sshll.u32 %s127, 4
          %s138 = int_to_ptr.vmem [resolvable:$true] %s137
          %143 = dma.hbm_to_vmem [thread:$0]  %s136, 2048, %s138, %s124, 128, 128, 8
        $region24: #{eca_forward.2} parent=19 // pred_fallthru
          _
      $region20: #{eca_forward.2} parent=5 // pred_fallthru
        _
      %p144 = scmp.le.s32.totalorder 1, %s11
      %p145 = scmp.lt.s32.totalorder %s11, 5
      %p146 = pnand %p144, %p145
      %p147 = pneg %p146
      // Predicated region
      $region25: #{eca_forward.2} parent=5 // pred_check
        _
      $region26: #{eca_forward.2} parent=5 // pred_check_branch
        %149 = sbr.rel (%p146) target = $region28
      $region27: #{eca_forward.2} parent=5 // pred_region
        %s150 = ssub.s32 %s11, 1
        %s151 = sand.u32 %s38, 1
        %s152 = scalar_lea.sflag [#allocation4], %s151
        %s153 = sand.u32 %s38, 1
        %s154 = smul.addr %s153, 128
        %s155 = scalar_lea.vmem [#allocation3], %s154
        // Predicated region
        $region29: #{eca_forward.2} parent=27 // pred_check
          %p156 = pneg %p51
        $region30: #{eca_forward.2} parent=27 // pred_check_branch
          %158 = sbr.rel (%p156) target = $region32
        $region31: #{eca_forward.2} parent=27 // pred_region
          %159 = dma.done %s152, 2048
        $region32: #{eca_forward.2} parent=27 // pred_fallthru
          _
        %s160 = sand.u32 %s38, 1
        %s161 = scalar_lea.sflag [#allocation4], %s160
        %s162 = sand.u32 %s38, 1
        %s163 = smul.addr %s162, 128
        %s164 = scalar_lea.vmem [#allocation3], %s163
        %p165 = pneg %p51
        %p166 = pneg %p48
        %p167 = pneg %p72
        %p168 = pneg %p69
        %p169 = pneg %p98
        %p170 = pneg %p95
        %p171 = scmp.lt.s32.totalorder %s20, 1
        %s172 = scalar_select %p171, %s20, 1
        %s173 = scalar_lea.vmem %s2, %s172
        %s174 = smul.u32 8, %s21
        %p175 = scmp.lt.s32.totalorder %s20, 1
        %s176 = scalar_select %p175, %s20, 1
        %s177 = scalar_lea.vmem %s2, %s176
        %p178 = scmp.eq.s32.totalorder %s21, 0
        // Predicated region
        $region33: #{eca_forward.2} parent=27 // pred_check
          %p179 = pneg %p178
        $region34: #{eca_forward.2} parent=27 // pred_check_branch
          %181 = sbr.rel (%p179) target = $region36
        $region35: #{eca_forward.2} parent=27 // pred_region
          %vm182 = vcmask 516096
          %183 = vst.msk [vmem:[#allocation2] sm:$0x1] %vm182, 0.0
        $region36: #{eca_forward.2} parent=27 // pred_fallthru
          _
        %v184 = vld [vmem:[#allocation2] sm:$0x1]
        %v185 = vld [vmem:[%s155] sm:$0xff]
        %v186 = vld [vmem:[%s155 + $0x8] sm:$0xff]
        %v187 = vld [vmem:[%s155 + $0x10] sm:$0xff]
        %v188 = vld [vmem:[%s155 + $0x18] sm:$0xff]
        %v189 = vld [vmem:[%s155 + $0x20] sm:$0xff]
        %v190 = vld [vmem:[%s155 + $0x28] sm:$0xff]
        %v191 = vld [vmem:[%s155 + $0x30] sm:$0xff]
        %v192 = vld [vmem:[%s155 + $0x38] sm:$0xff]
        %v193 = vld [vmem:[%s155 + $0x40] sm:$0xff]
        %v194 = vld [vmem:[%s155 + $0x48] sm:$0xff]
        %v195 = vld [vmem:[%s155 + $0x50] sm:$0xff]
        %v196 = vld [vmem:[%s155 + $0x58] sm:$0xff]
        %v197 = vld [vmem:[%s155 + $0x60] sm:$0xff]
        %v198 = vld [vmem:[%s155 + $0x68] sm:$0xff]
        %v199 = vld [vmem:[%s155 + $0x70] sm:$0xff]
        %v200 = vld [vmem:[%s155 + $0x78] sm:$0xff]
        %vm201 = vcmask 523264
        %v202 = vsel %vm201, %v185, 0.0
        %v203 = vsel %vm201, %v186, 0.0
        %v204 = vadd.f32 %v202, %v203
        %v205 = vsel %vm201, %v187, 0.0
        %v206 = vadd.f32 %v204, %v205
        %v207 = vsel %vm201, %v188, 0.0
        %v208 = vadd.f32 %v206, %v207
        %v209 = vsel %vm201, %v189, 0.0
        %v210 = vadd.f32 %v208, %v209
        %v211 = vsel %vm201, %v190, 0.0
        %v212 = vadd.f32 %v210, %v211
        %v213 = vsel %vm201, %v191, 0.0
        %v214 = vadd.f32 %v212, %v213
        %v215 = vsel %vm201, %v192, 0.0
        %v216 = vadd.f32 %v214, %v215
        %v217 = vsel %vm201, %v193, 0.0
        %v218 = vadd.f32 %v216, %v217
        %v219 = vsel %vm201, %v194, 0.0
        %v220 = vadd.f32 %v218, %v219
        %v221 = vsel %vm201, %v195, 0.0
        %v222 = vadd.f32 %v220, %v221
        %v223 = vsel %vm201, %v196, 0.0
        %v224 = vadd.f32 %v222, %v223
        %v225 = vsel %vm201, %v197, 0.0
        %v226 = vadd.f32 %v224, %v225
        %v227 = vsel %vm201, %v198, 0.0
        %v228 = vadd.f32 %v226, %v227
        %v229 = vsel %vm201, %v199, 0.0
        %v230 = vadd.f32 %v228, %v229
        %v231 = vsel %vm201, %v200, 0.0
        %v232 = vadd.f32 %v230, %v231
        %v233 = vrot.slane %v232, 4
        %v234 = vadd.f32 %v232, %v233
        %v235 = vrot.slane %v234, 2
        %v236 = vadd.f32 %v234, %v235
        %v237 = vrot.slane %v236, 1
        %v238 = vadd.f32 %v236, %v237
        %v239 = vadd.f32 %v184, %v238
        %vm240 = vcmask 516096
        %241 = vst.msk [vmem:[#allocation2] sm:$0x1] %vm240, %v239
        %p242 = scmp.eq.s32.totalorder %s21, 1
        // Predicated region
        $region37: #{eca_forward.2} parent=27 // pred_check
          %p243 = pneg %p242
        $region38: #{eca_forward.2} parent=27 // pred_check_branch
          %245 = sbr.rel (%p243) target = $region40
        $region39: #{eca_forward.2} parent=27 // pred_region
          %v246 = vld [vmem:[#allocation2] sm:$0x1]
          %v247 = vmul.f32 %v246, 0.00390625
          %v248 = vld [vmem:[%s1] sm:$0xff]
          %v249 = vld [vmem:[%s1 + $0x8] sm:$0xff]
          %v250 = vld [vmem:[%s1 + $0x10] sm:$0xff]
          %v251 = vld [vmem:[%s1 + $0x18] sm:$0xff]
          %v252 = vld [vmem:[%s1 + $0x20] sm:$0xff]
          %v253 = vld [vmem:[%s1 + $0x28] sm:$0xff]
          %v254 = vld [vmem:[%s1 + $0x30] sm:$0xff]
          %v255 = vld [vmem:[%s1 + $0x38] sm:$0xff]
          %v257 = vsel %vm201, %v247, 0
          %259 = vmatprep.subr.mxu0 0.0
          %260 = vmatpush1.msra.mxu0 %v248
          %261 = vmatprep.subr.mxu0 0.0
          %262 = vmatpush1.msra.mxu0 %v249
          %263 = vmatprep.subr.mxu0 0.0
          %264 = vmatpush1.msra.mxu0 %v250
          %265 = vmatprep.subr.mxu0 0.0
          %266 = vmatpush1.msra.mxu0 %v251
          %267 = vmatprep.subr.mxu0 0.0
          %268 = vmatpush1.msra.mxu0 %v252
          %269 = vmatprep.subr.mxu0 0.0
          %270 = vmatpush1.msra.mxu0 %v253
          %271 = vmatprep.subr.mxu0 0.0
          %272 = vmatpush1.msra.mxu0 %v254
          %273 = vmatprep.subr.mxu0 0.0
          %274 = vmatpush1.msra.mxu0 %v255
          %275 = vmatprep.subr.mxu0 0.0
          %276 = vmatpush1.msra.mxu0 0.0
          %277 = vmatprep.subr.mxu0 0.0
          %278 = vmatpush1.msra.mxu0 0.0
          %279 = vmatprep.subr.mxu0 0.0
          %280 = vmatpush1.msra.mxu0 0.0
          %281 = vmatprep.subr.mxu0 0.0
          %282 = vmatpush1.msra.mxu0 0.0
          %283 = vmatprep.subr.mxu0 0.0
          %284 = vmatpush1.msra.mxu0 0.0
          %285 = vmatprep.subr.mxu0 0.0
          %286 = vmatpush1.msra.mxu0 0.0
          %287 = vmatprep.subr.mxu0 0.0
          %288 = vmatpush1.msra.mxu0 0.0
          %289 = vmatprep.subr.mxu0 0.0
          %290 = vmatpush1.msra.mxu0 0.0
          %291 = vmatprep.subr.mxu0 0.0
          %292 = vmatpush1.msra.mxu0 0.0
          %293 = vmatprep.subr.mxu0 0.0
          %294 = vmatpush1.msra.mxu0 0.0
          %295 = vmatprep.subr.mxu0 0.0
          %296 = vmatpush1.msra.mxu0 0.0
          %297 = vmatprep.subr.mxu0 0.0
          %298 = vmatpush1.msra.mxu0 0.0
          %299 = vmatprep.subr.mxu0 0.0
          %300 = vmatpush1.msra.mxu0 0.0
          %301 = vmatprep.subr.mxu0 0.0
          %302 = vmatpush1.msra.mxu0 0.0
          %303 = vmatprep.subr.mxu0 0.0
          %304 = vmatpush1.msra.mxu0 0.0
          %305 = vmatprep.subr.mxu0 0.0
          %306 = vmatpush1.msra.mxu0 0.0
          %307 = vmatprep.subr.mxu0 0.0
          %308 = vmatpush1.msra.mxu0 0.0
          %309 = vmatprep.subr.mxu0 0.0
          %310 = vmatpush1.msra.mxu0 0.0
          %311 = vmatprep.subr.mxu0 0.0
          %312 = vmatpush1.msra.mxu0 0.0
          %313 = vmatprep.subr.mxu0 0.0
          %314 = vmatpush1.msra.mxu0 0.0
          %315 = vmatprep.subr.mxu0 0.0
          %316 = vmatpush1.msra.mxu0 0.0
          %317 = vmatprep.subr.mxu0 0.0
          %318 = vmatpush1.msra.mxu0 0.0
          %319 = vmatprep.subr.mxu0 0.0
          %320 = vmatpush1.msra.mxu0 0.0
          %321 = vmatprep.subr.mxu0 0.0
          %322 = vmatpush1.msra.mxu0 0.0
          %323 = vmatprep.mubr.f32.mxu0 0.0
          %324 = vmatmul.mubr.f32.gmra.mrb[0].mxu0 %v257
          %v325 = vpop.f32.mrb[0].mxu0
          %v326 = vadd.f32 0.0, %v325
          %v327 = vpop.f32.mrb[0].mxu0
          %328 = vdwg.mxu0
          %v329 = vsub.f32 0.0, %v326
          %v330 = vmul.f32 %v329, 1.442695
          %v331 = vpow.pop %v330
          %v332 = vadd.f32 %v331, 1.0
          %v333 = vrcp.pop %v332
          %v334 = vmul.f32 1.0, %v333
          %335 = vst.msk [vmem:[%s177] sm:$0x1] %vm240, %v334
        $region40: #{eca_forward.2} parent=27 // pred_fallthru
          _
        %p336 = scmp.lt.s32.totalorder %s20, 1
        %s337 = scalar_select %p336, %s20, 1
        %s338 = scalar_lea.vmem %s2, %s337
        // Predicated region
        $region41: #{eca_forward.2} parent=27 // pred_check
          %p339 = pneg %p95
        $region42: #{eca_forward.2} parent=27 // pred_check_branch
          %341 = sbr.rel (%p339) target = $region44
        $region43: #{eca_forward.2} parent=27 // pred_region
          _
        $region44: #{eca_forward.2} parent=27 // pred_fallthru
          _
      $region28: #{eca_forward.2} parent=5 // pred_fallthru
        _
      %p342 = scmp.le.s32.totalorder 2, %s11
      // Predicated region
      $region45: #{eca_forward.2} parent=5 // pred_check
        %p343 = pneg %p342
      $region46: #{eca_forward.2} parent=5 // pred_check_branch
        %345 = sbr.rel (%p343) target = $region48
      $region47: #{eca_forward.2} parent=5 // pred_region
        %s346 = ssub.s32 %s11, 2
        // Predicated region
        $region49: #{eca_forward.2} parent=47 // pred_check
          %p347 = pneg %p101
        $region50: #{eca_forward.2} parent=47 // pred_check_branch
          %349 = sbr.rel (%p347) target = $region52
        $region51: #{eca_forward.2} parent=47 // pred_region
          %p350 = scmp.lt.s32.totalorder %s22, 1
          %s351 = scalar_select %p350, %s22, 1
          %s352 = scalar_lea.vmem %s2, %s351
        $region52: #{eca_forward.2} parent=47 // pred_fallthru
          _
      $region48: #{eca_forward.2} parent=5 // pred_fallthru
        _
    $region6: #{eca_forward.2} parent=1 // loop_footer
      %s15 = sadd.s32 1, %s11
    $region7: #{eca_forward.2} parent=1 // loop_footer_branch
      %10 = sbr.rel target = $region3
    $region8: #{eca_forward.2} parent=1 // loop_exit
      _
    %353 = vsyncpa [#allocation4], 1
    %s354 = scalar_lea.sflag [#allocation4], 1
    %355 = vsyncpa %s354, 1

// kernel: eca_forward.3
$region0: #{eca_forward.3}
  #allocation0 [shape = 'u32[]', space=smem, size = 0x4, offset = 0x4, fixed_abs, tag = 'smem constant byte address 0x4 - core index']
  #allocation1 [shape = 'u32[144,128]{1,0:T(1,128)}', space=vmem, size = 0x12000, scoped, tag = 'internal scratch']
  %s0 = inlined_call_operand.vmem [shape: f32[2,16,16,64], index: 0, kind: input, shape index: {}]
  %s1 = inlined_call_operand.vmem [shape: f32[2,1,64], index: 1, kind: input, shape index: {}]
  %s2 = inlined_call_operand.hbm [shape: f32[2,16,16,64], index: 2, kind: output, shape index: {}]
  %s3 = sld [smem:[#allocation0]]
  $region41: #{eca_forward.3} parent=0
    _
  %s5 = ssub.s32 1, %s3
  %s6 = scalar_select 0, %s5, %s3
  $region1: #{eca_forward.3} parent=0
    #allocation2 [shape = 'u8[131072]{0}', space=vmem, size = 0x20000, scoped, tag = 'output window, operand 0']
    #allocation3 [shape = 's32[2]{0}', space=sflag, size = 0x8, scoped, tag = 'scoped memory for eca_forward.3']
    %7 = vsyncpa [#allocation3], 0
    %s8 = scalar_lea.sflag [#allocation3], 1
    %9 = vsyncpa %s8, 0
    loop: start=0, step=1, limit=6
    $region2: #{eca_forward.3} parent=1 // loop_pre_header
      _
    $region3: #{eca_forward.3} parent=1 // loop_header
      %s11 = sphi 0, %s15
      %p12 = scmp.ge.s32.totalorder %s11, 6
      %s18 = sphi 0, %s30
      %s19 = sphi 0, %s26
      %s20 = sphi 0, %s18
      %s21 = sphi 0, %s19
      %s22 = sphi 0, %s20
      %s23 = sphi 0, %s21
      %s35 = sphi 0, %s37
      %s38 = sphi 0, %s35
      %s39 = sphi 0, %s38
      %s55 = sphi 0, %s39
      %s61 = sphi 0, %s63
      %s64 = sphi 0, %s61
      %s65 = sphi 0, %s64
      %s81 = sphi 0, %s65
      %s89 = sphi 0, %s91
      %s92 = sphi 0, %s89
      %s93 = sphi 0, %s92
      %s109 = sphi 0, %s93
    $region4: #{eca_forward.3} parent=1 // loop_header_branch
      %14 = sbr.rel (%p12) target = $region8
    $region5: #{eca_forward.3} parent=1 // loop_body
      %s16 = ssub.s32 %s11, 1
      %s17 = ssub.s32 %s11, 2
      %s24 = sadd.s32 1, %s19
      %p25 = scmp.ge.s32.totalorder %s24, 2
      %s26 = scalar_select %p25, 0, %s24
      %s27 = sadd.s32 1, %s18
      %s28 = scalar_select %p25, %s27, %s18
      %p29 = scmp.ge.s32.totalorder %s28, 2
      %s30 = scalar_select %p29, 0, %s28
      %s31 = ssub.s32 %s18, %s30
      %s32 = ssub.s32 %s19, %s26
      %s33 = sor.u32 %s31, %s32
      %p34 = scmp.eq.s32.totalorder %s33, 0
      %s36 = sadd.s32 %s35, 1
      %s37 = scalar_select %p34, %s35, %s36
      %p40 = pneg %p34
      %p41 = scmp.eq.s32.totalorder %s11, 3
      %p42 = por %p40, %p41
      %p43 = scmp.ne.s32.totalorder %s35, %s38
      %p44 = scmp.eq.s32.totalorder %s11, 0
      %p45 = por %p43, %p44
      %p46 = scmp.ne.s32.totalorder %s35, %s38
      %p47 = scmp.eq.s32.totalorder %s16, 3
      %p48 = por %p46, %p47
      %p49 = scmp.ne.s32.totalorder %s38, %s39
      %p50 = scmp.eq.s32.totalorder %s16, 0
      %p51 = por %p49, %p50
      %p52 = scmp.ne.s32.totalorder %s38, %s39
      %p53 = scmp.eq.s32.totalorder %s17, 3
      %p54 = por %p52, %p53
      %p56 = scmp.ne.s32.totalorder %s39, %s55
      %p57 = scmp.eq.s32.totalorder %s17, 0
      %p58 = por %p56, %p57
      %s59 = ssub.s32 %s18, %s30
      %p60 = scmp.eq.s32.totalorder %s59, 0
      %s62 = sadd.s32 %s61, 1
      %s63 = scalar_select %p60, %s61, %s62
      %p66 = pneg %p60
      %p67 = scmp.eq.s32.totalorder %s11, 3
      %p68 = por %p66, %p67
      %p69 = scmp.ne.s32.totalorder %s61, %s64
      %p70 = scmp.eq.s32.totalorder %s11, 0
      %p71 = por %p69, %p70
      %p72 = scmp.ne.s32.totalorder %s61, %s64
      %p73 = scmp.eq.s32.totalorder %s16, 3
      %p74 = por %p72, %p73
      %p75 = scmp.ne.s32.totalorder %s64, %s65
      %p76 = scmp.eq.s32.totalorder %s16, 0
      %p77 = por %p75, %p76
      %p78 = scmp.ne.s32.totalorder %s64, %s65
      %p79 = scmp.eq.s32.totalorder %s17, 3
      %p80 = por %p78, %p79
      %p82 = scmp.ne.s32.totalorder %s65, %s81
      %p83 = scmp.eq.s32.totalorder %s17, 0
      %p84 = por %p82, %p83
      %s85 = ssub.s32 %s18, %s30
      %s86 = ssub.s32 %s19, %s26
      %s87 = sor.u32 %s85, %s86
      %p88 = scmp.eq.s32.totalorder %s87, 0
      %s90 = sadd.s32 %s89, 1
      %s91 = scalar_select %p88, %s89, %s90
      %p94 = pneg %p88
      %p95 = scmp.eq.s32.totalorder %s11, 3
      %p96 = por %p94, %p95
      %p97 = scmp.ne.s32.totalorder %s89, %s92
      %p98 = scmp.eq.s32.totalorder %s11, 0
      %p99 = por %p97, %p98
      %p100 = scmp.ne.s32.totalorder %s89, %s92
      %p101 = scmp.eq.s32.totalorder %s16, 3
      %p102 = por %p100, %p101
      %p103 = scmp.ne.s32.totalorder %s92, %s93
      %p104 = scmp.eq.s32.totalorder %s16, 0
      %p105 = por %p103, %p104
      %p106 = scmp.ne.s32.totalorder %s92, %s93
      %p107 = scmp.eq.s32.totalorder %s17, 3
      %p108 = por %p106, %p107
      %p110 = scmp.ne.s32.totalorder %s93, %s109
      %p111 = scmp.eq.s32.totalorder %s17, 0
      %p112 = por %p110, %p111
      %p113 = scmp.le.s32.totalorder 1, %s11
      %p114 = scmp.lt.s32.totalorder %s11, 5
      %p115 = pnand %p113, %p114
      %p116 = pneg %p115
      // Predicated region
      $region9: #{eca_forward.3} parent=5 // pred_check
        _
      $region10: #{eca_forward.3} parent=5 // pred_check_branch
        %118 = sbr.rel (%p115) target = $region12
      $region11: #{eca_forward.3} parent=5 // pred_region
        %s119 = ssub.s32 %s11, 1
      $region12: #{eca_forward.3} parent=5 // pred_fallthru
        _
      %p120 = scmp.lt.s32.totalorder %s11, 4
      // Predicated region
      $region13: #{eca_forward.3} parent=5 // pred_check
        %p121 = pneg %p120
      $region14: #{eca_forward.3} parent=5 // pred_check_branch
        %123 = sbr.rel (%p121) target = $region16
      $region15: #{eca_forward.3} parent=5 // pred_region
        // Predicated region
        $region17: #{eca_forward.3} parent=15 // pred_check
          %p124 = pneg %p45
        $region18: #{eca_forward.3} parent=15 // pred_check_branch
          %126 = sbr.rel (%p124) target = $region20
        $region19: #{eca_forward.3} parent=15 // pred_region
          %s127 = smul.u32 8, %s19
          %p128 = scmp.lt.s32.totalorder %s18, 1
          %s129 = scalar_select %p128, %s18, 1
          %p130 = scmp.lt.s32.totalorder %s127, 15
          %s131 = scalar_select %p130, %s127, 15
          %s132 = smul.addr %s131, 2
          %s133 = smul.addr %s129, 32
          %s134 = sadd.s32 %s132, %s133
          %s135 = smul.addr %s134, 8
          %s136 = scalar_lea.vmem %s0, %s135
          %s137 = smul.u32 8, %s19
        $region20: #{eca_forward.3} parent=15 // pred_fallthru
          _
        // Predicated region
        $region21: #{eca_forward.3} parent=15 // pred_check
          %p138 = pneg %p71
        $region22: #{eca_forward.3} parent=15 // pred_check_branch
          %140 = sbr.rel (%p138) target = $region24
        $region23: #{eca_forward.3} parent=15 // pred_region
          %p141 = scmp.lt.s32.totalorder %s18, 1
          %s142 = scalar_select %p141, %s18, 1
          %s143 = scalar_lea.vmem %s1, %s142
        $region24: #{eca_forward.3} parent=15 // pred_fallthru
          _
      $region16: #{eca_forward.3} parent=5 // pred_fallthru
        _
      %p144 = scmp.le.s32.totalorder 1, %s11
      %p145 = scmp.lt.s32.totalorder %s11, 5
      %p146 = pnand %p144, %p145
      %p147 = pneg %p146
      // Predicated region
      $region25: #{eca_forward.3} parent=5 // pred_check
        _
      $region26: #{eca_forward.3} parent=5 // pred_check_branch
        %149 = sbr.rel (%p146) target = $region28
      $region27: #{eca_forward.3} parent=5 // pred_region
        %s150 = ssub.s32 %s11, 1
        %s151 = smul.u32 8, %s21
        %p152 = scmp.lt.s32.totalorder %s20, 1
        %s153 = scalar_select %p152, %s20, 1
        %p154 = scmp.lt.s32.totalorder %s151, 15
        %s155 = scalar_select %p154, %s151, 15
        %s156 = smul.addr %s155, 2
        %s157 = smul.addr %s153, 32
        %s158 = sadd.s32 %s156, %s157
        %s159 = smul.addr %s158, 8
        %s160 = scalar_lea.vmem %s0, %s159
        %p161 = pneg %p51
        %p162 = pneg %p48
        %p163 = scmp.lt.s32.totalorder %s20, 1
        %s164 = scalar_select %p163, %s20, 1
        %s165 = scalar_lea.vmem %s1, %s164
        %p166 = pneg %p77
        %p167 = pneg %p74
        %p168 = pneg %p105
        %p169 = pneg %p102
        %s170 = sand.u32 %s92, 1
        %s171 = scalar_lea.sflag [#allocation3], %s170
        %s172 = sand.u32 %s92, 1
        %s173 = smul.addr %s172, 128
        %s174 = scalar_lea.vmem [#allocation2], %s173
        %s175 = smul.u32 8, %s21
        %p176 = scmp.lt.s32.totalorder %s20, 1
        %s177 = scalar_select %p176, %s20, 1
        %p178 = scmp.lt.s32.totalorder %s175, 15
        %s179 = scalar_select %p178, %s175, 15
        %s180 = smul.addr %s179, 2
        %s181 = smul.addr %s177, 32
        %s182 = sadd.s32 %s180, %s181
        %s183 = smul.addr %s182, 8
        %s184 = scalar_lea.vmem %s0, %s183
        %s185 = smul.u32 8, %s21
        %p186 = scmp.lt.s32.totalorder %s20, 1
        %s187 = scalar_select %p186, %s20, 1
        %s188 = scalar_lea.vmem %s1, %s187
        %s189 = smul.u32 8, %s21
        %v190 = vld [vmem:[%s184] sm:$0xff]
        %v191 = vld [vmem:[%s184 + $0x8] sm:$0xff]
        %v192 = vld [vmem:[%s184 + $0x10] sm:$0xff]
        %v193 = vld [vmem:[%s184 + $0x18] sm:$0xff]
        %v194 = vld [vmem:[%s184 + $0x20] sm:$0xff]
        %v195 = vld [vmem:[%s184 + $0x28] sm:$0xff]
        %v196 = vld [vmem:[%s184 + $0x30] sm:$0xff]
        %v197 = vld [vmem:[%s184 + $0x38] sm:$0xff]
        %v198 = vld [vmem:[%s184 + $0x40] sm:$0xff]
        %v199 = vld [vmem:[%s184 + $0x48] sm:$0xff]
        %v200 = vld [vmem:[%s184 + $0x50] sm:$0xff]
        %v201 = vld [vmem:[%s184 + $0x58] sm:$0xff]
        %v202 = vld [vmem:[%s184 + $0x60] sm:$0xff]
        %v203 = vld [vmem:[%s184 + $0x68] sm:$0xff]
        %v204 = vld [vmem:[%s184 + $0x70] sm:$0xff]
        %v205 = vld [vmem:[%s184 + $0x78] sm:$0xff]
        %v206 = vld [vmem:[%s188] sm:$0x1]
        %v208 = vlaneseq
        %v209 = vshrl.u32 %v208, 7
        %v210 = vsub.s32 0, %v209
        %v211 = vrot.slane %v206, %v210
        %v213 = vmul.f32 %v190, %v211
        %v214 = vmul.f32 %v191, %v211
        %v215 = vmul.f32 %v192, %v211
        %v216 = vmul.f32 %v193, %v211
        %v217 = vmul.f32 %v194, %v211
        %v218 = vmul.f32 %v195, %v211
        %v219 = vmul.f32 %v196, %v211
        %v220 = vmul.f32 %v197, %v211
        %v221 = vmul.f32 %v198, %v211
        %v222 = vmul.f32 %v199, %v211
        %v223 = vmul.f32 %v200, %v211
        %v224 = vmul.f32 %v201, %v211
        %v225 = vmul.f32 %v202, %v211
        %v226 = vmul.f32 %v203, %v211
        %v227 = vmul.f32 %v204, %v211
        %v228 = vmul.f32 %v205, %v211
        %vm229 = vcmask 523264
        %230 = vst.msk [vmem:[%s174] sm:$0xff] %vm229, %v213
        %231 = vst.msk [vmem:[%s174 + $0x8] sm:$0xff] %vm229, %v214
        %232 = vst.msk [vmem:[%s174 + $0x10] sm:$0xff] %vm229, %v215
        %233 = vst.msk [vmem:[%s174 + $0x18] sm:$0xff] %vm229, %v216
        %234 = vst.msk [vmem:[%s174 + $0x20] sm:$0xff] %vm229, %v217
        %235 = vst.msk [vmem:[%s174 + $0x28] sm:$0xff] %vm229, %v218
        %236 = vst.msk [vmem:[%s174 + $0x30] sm:$0xff] %vm229, %v219
        %237 = vst.msk [vmem:[%s174 + $0x38] sm:$0xff] %vm229, %v220
        %238 = vst.msk [vmem:[%s174 + $0x40] sm:$0xff] %vm229, %v221
        %239 = vst.msk [vmem:[%s174 + $0x48] sm:$0xff] %vm229, %v222
        %240 = vst.msk [vmem:[%s174 + $0x50] sm:$0xff] %vm229, %v223
        %241 = vst.msk [vmem:[%s174 + $0x58] sm:$0xff] %vm229, %v224
        %242 = vst.msk [vmem:[%s174 + $0x60] sm:$0xff] %vm229, %v225
        %243 = vst.msk [vmem:[%s174 + $0x68] sm:$0xff] %vm229, %v226
        %244 = vst.msk [vmem:[%s174 + $0x70] sm:$0xff] %vm229, %v227
        %245 = vst.msk [vmem:[%s174 + $0x78] sm:$0xff] %vm229, %v228
        %s246 = sand.u32 %s92, 1
        %s247 = scalar_lea.sflag [#allocation3], %s246
        %s248 = sand.u32 %s92, 1
        %s249 = smul.addr %s248, 128
        %s250 = scalar_lea.vmem [#allocation2], %s249
        // Predicated region
        $region29: #{eca_forward.3} parent=27 // pred_check
          %p251 = pneg %p102
        $region30: #{eca_forward.3} parent=27 // pred_check_branch
          %253 = sbr.rel (%p251) target = $region32
        $region31: #{eca_forward.3} parent=27 // pred_region
          %s254 = smul.u32 8, %s21
          %s256 = ssub.s32 2048, 2048
          %257 = vsyncadd %s247, %s256
          %s258 = smul.addr %s254, 2
          %s259 = smul.addr %s20, 32
          %s260 = sadd.s32 %s258, %s259
          %s261 = smul.addr %s260, 128
          %s262 = scalar_lea.hbm %s2, %s261
          %s263 = sshll.u32 %s250, 4
          %s264 = int_to_ptr.vmem [resolvable:$true] %s263
          %269 = dma.vmem_to_hbm [thread:$0]  %s264, 2048, %s262, %s247, 128, 128, 8
        $region32: #{eca_forward.3} parent=27 // pred_fallthru
          _
      $region28: #{eca_forward.3} parent=5 // pred_fallthru
        _
      %p270 = scmp.le.s32.totalorder 2, %s11
      // Predicated region
      $region33: #{eca_forward.3} parent=5 // pred_check
        %p271 = pneg %p270
      $region34: #{eca_forward.3} parent=5 // pred_check_branch
        %273 = sbr.rel (%p271) target = $region36
      $region35: #{eca_forward.3} parent=5 // pred_region
        %s274 = ssub.s32 %s11, 2
        // Predicated region
        $region37: #{eca_forward.3} parent=35 // pred_check
          %p275 = pneg %p108
        $region38: #{eca_forward.3} parent=35 // pred_check_branch
          %277 = sbr.rel (%p275) target = $region40
        $region39: #{eca_forward.3} parent=35 // pred_region
          %s278 = sand.u32 %s93, 1
          %s279 = scalar_lea.sflag [#allocation3], %s278
          %s280 = sand.u32 %s93, 1
          %s281 = smul.addr %s280, 128
          %s282 = scalar_lea.vmem [#allocation2], %s281
          %283 = dma.done %s279, 2048
        $region40: #{eca_forward.3} parent=35 // pred_fallthru
          _
      $region36: #{eca_forward.3} parent=5 // pred_fallthru
        _
    $region6: #{eca_forward.3} parent=1 // loop_footer
      %s15 = sadd.s32 1, %s11
    $region7: #{eca_forward.3} parent=1 // loop_footer_branch
      %10 = sbr.rel target = $region3
    $region8: #{eca_forward.3} parent=1 // loop_exit
      _
    %284 = vsyncpa [#allocation3], 1
    %s285 = scalar_lea.sflag [#allocation3], 1
    %286 = vsyncpa %s285, 1

</llo_original>
